<compile_context>
chip_gen: v5e
topology: v5e:2x2
jax: 0.10.0
libtpu: 0.0.40
codegen_flags: <defaults>
</compile_context>

<pallas_src>
import math

import jax
import jax.numpy as jnp
from jax.experimental import pallas as pl
from jax.experimental.pallas import tpu as pltpu


def _round_up(x, m):
    return (x + m - 1) // m * m


def _pick_tiles(N, *, tm_max=512, tk_max=512):
    """Choose (tm, tk, Np) for an (N, N) adjacency.

    Tiles are powers-of-two multiples of 128 so lcm(tm, tk) == max(tm, tk).
    tk is made as large as possible (>=256 when N allows, to fill the v6e/v7x
    MXU contraction depth).  tm is made as large as possible while keeping the
    row (parallel) grid axis >= 2 steps so v7x's two TensorCores share work.
    """
    candidates = [c for c in (512, 256, 128) if c <= tm_max or c == 128]
    Np0 = _round_up(N, 128)

    tk = 128
    for cand in (512, 256, 128):
        if cand <= tk_max and cand <= Np0:
            tk = cand
            break

    tm = 128
    for cand in candidates:
        if cand <= Np0 and _round_up(Np0, max(cand, tk)) // cand >= 2:
            tm = cand
            break

    Np = _round_up(N, max(tm, tk))
    return tm, tk, Np


def prepare_adj(adj, *, tm_max=512, tk_max=512):
    """Pad adj to the tile grid and cast to bf16.

    Do this ONCE outside the training loop and reuse the result every forward;
    padding columns are zero, which is load-bearing (padded feat rows produce
    h = LeakyReLU(bf) != 0 and are nulled only by adj's zero columns).
    """
    N = adj.shape[0]
    _, _, Np = _pick_tiles(N, tm_max=tm_max, tk_max=tk_max)
    return jnp.pad(adj, ((0, Np - N), (0, Np - N))).astype(jnp.bfloat16)


def gnn_layer_kernel(gate_ref,       # SMEM (1,1) f32 : sigmoid(beta)
                     adj_ref,        # VMEM (TM, TK) bf16
                     feat_k_ref,     # VMEM (TK, F)  bf16  (k-rows of feat)
                     feat_i_ref,     # VMEM (TM, F)  bf16  (i-rows of feat)
                     wf_ref,         # VMEM (F, Hp)  bf16
                     bf_ref,         # VMEM (1, Hp)  f32
                     wm_ref,         # VMEM (F, Hp)  bf16
                     bm_ref,         # VMEM (1, Hp)  f32
                     hp_ref):        # VMEM (TM, Hp) f32  (output / accumulator)
    k = pl.program_id(1)

    @pl.when(k == 0)
    def _():
        hp_ref[...] = jnp.zeros_like(hp_ref)

    # h for the current K-tile of nodes: LeakyReLU(feat[k] @ Wf + bf), f32.
    # Rematerialized per row-tile: streaming feat_k (tk*F bf16) is cheaper
    # than streaming a precomputed h (tk*Hp bf16) while F < Hp.
    h = jnp.dot(feat_k_ref[...], wf_ref[...], preferred_element_type=jnp.float32)
    h = h + bf_ref[...]
    h = jnp.where(h > 0, h, 0.01 * h)

    # Accumulate adj[i, k] @ h_k directly into the resident output block
    # (out index_map ignores k), bf16 operands / f32 accumulate on the MXU.
    hp_ref[...] += jnp.dot(adj_ref[...], h.astype(jnp.bfloat16),
                           preferred_element_type=jnp.float32)

    @pl.when(k == pl.num_programs(1) - 1)
    def _():
        # z for the current row-tile: LeakyReLU(feat[i] @ Wm + bm), f32.
        z = jnp.dot(feat_i_ref[...], wm_ref[...],
                    preferred_element_type=jnp.float32)
        z = z + bm_ref[...]
        z = jnp.where(z > 0, z, 0.01 * z)

        gate = gate_ref[0, 0]                       # sigmoid(beta), scalar
        hp_ref[...] = gate * z + (1.0 - gate) * hp_ref[...]


def gnn_layer(feat, adj, wf, bf, wm, bm, beta, *, tm_max=512, tk_max=512):
    """Returns (hp, sigmoid(beta)) matching the module's forward().

    `adj` may be either the raw (N, N) f32 adjacency or the padded bf16 array
    produced by prepare_adj() (preferred: prepare once, reuse every call).
    """
    N, F = feat.shape
    H = wf.shape[1]

    tm, tk, Np = _pick_tiles(N, tm_max=tm_max, tk_max=tk_max)
    Hp = _round_up(H, 128)                      # lane-dense hidden dim

    if adj.dtype == jnp.bfloat16 and adj.shape == (Np, Np):
        adj_p = adj                             # already prepared / cached
    else:
        adj_p = prepare_adj(adj, tm_max=tm_max, tk_max=tk_max)

    # Pad + cast the small operands (O(N*F), cheap per call).
    feat_p = jnp.pad(feat, ((0, Np - N), (0, 0))).astype(jnp.bfloat16)
    wf_p = jnp.pad(wf, ((0, 0), (0, Hp - H))).astype(jnp.bfloat16)
    wm_p = jnp.pad(wm, ((0, 0), (0, Hp - H))).astype(jnp.bfloat16)
    bf_p = jnp.pad(bf, ((0, 0), (0, Hp - H))).astype(jnp.float32)
    bm_p = jnp.pad(bm, ((0, 0), (0, Hp - H))).astype(jnp.float32)

    gate = jax.nn.sigmoid(beta).astype(jnp.float32)   # (1, 1)

    n_row_tiles = Np // tm
    n_k_tiles = Np // tk
    grid = (n_row_tiles, n_k_tiles)

    cost = pl.CostEstimate(
        # adj@h + rematerialized h (once per row-tile) + z.
        flops=(2 * Np * Np * Hp
               + 2 * n_row_tiles * Np * F * Hp
               + 2 * Np * F * Hp),
        transcendentals=0,
        # adj (bf16) + feat_k re-streamed per row-tile (bf16) + feat_i (bf16)
        # + output (f32) + weights/biases.
        bytes_accessed=(2 * Np * Np
                        + 2 * n_row_tiles * Np * F
                        + 2 * Np * F
                        + 4 * Np * Hp
                        + 2 * 2 * F * Hp + 2 * 4 * Hp),
    )

    hp_p = pl.pallas_call(
        gnn_layer_kernel,
        out_shape=jax.ShapeDtypeStruct((Np, Hp), jnp.float32),
        grid=grid,
        in_specs=[
            pl.BlockSpec(memory_space=pltpu.MemorySpace.SMEM),   # gate scalar
            pl.BlockSpec((tm, tk), lambda i, k: (i, k)),         # adj tile
            pl.BlockSpec((tk, F), lambda i, k: (k, 0)),          # feat k-rows
            pl.BlockSpec((tm, F), lambda i, k: (i, 0)),          # feat i-rows
            pl.BlockSpec((F, Hp), lambda i, k: (0, 0)),          # Wf (resident)
            pl.BlockSpec((1, Hp), lambda i, k: (0, 0)),          # bf
            pl.BlockSpec((F, Hp), lambda i, k: (0, 0)),          # Wm (resident)
            pl.BlockSpec((1, Hp), lambda i, k: (0, 0)),          # bm
        ],
        out_specs=pl.BlockSpec((tm, Hp), lambda i, k: (i, 0)),
        compiler_params=pltpu.CompilerParams(
            dimension_semantics=("parallel", "arbitrary")),
        cost_estimate=cost,
    )(gate, adj_p, feat_p, feat_p, wf_p, bf_p, wm_p, bm_p)

    return hp_p[:N, :H], gate


def xavier_uniform(key, fan_in, fan_out):
    # Matches torch.nn.init.xavier_uniform_ for a Linear weight of shape
    # (fan_out, fan_in); returned already transposed to (fan_in, fan_out).
    limit = math.sqrt(6.0 / (fan_in + fan_out))
    return jax.random.uniform(key, (fan_in, fan_out), jnp.float32,
                              minval=-limit, maxval=limit)


if __name__ == "__main__":
    nfeat, nhid, N = 32, 32, 256   # N=256 -> tm=128, tk=256, grid=(2, 1)

    key = jax.random.PRNGKey(0)
    k_feat, k_adj, k_wf, k_wm = jax.random.split(key, 4)

    feat = jax.random.normal(k_feat, (N, nfeat), jnp.float32)
    adj = jax.random.uniform(k_adj, (N, N), jnp.float32)

    # Parameters (deterministic init mirroring the module's __init__).
    wf = xavier_uniform(k_wf, nfeat, nhid)
    bf = jnp.full((1, nhid), 0.01, jnp.float32)
    wm = xavier_uniform(k_wm, nfeat, nhid)
    bm = jnp.full((1, nhid), 0.01, jnp.float32)
    beta = jnp.zeros((1, 1), jnp.float32)

    # Prepare adj once (bf16, tile-padded) and reuse it -- this is the path a
    # training loop should take; a raw f32 adj also works (prepared in-line).
    adj_prepped = prepare_adj(adj)

    hp, beta_out = gnn_layer(feat, adj_prepped, wf, bf, wm, bm, beta)
    jax.block_until_ready((hp, beta_out))

    # Reference in plain JAX, mirroring the kernel's bf16-operand / f32-acc
    # matmul math so the check is tight.
    def leaky(x):
        return jnp.where(x > 0, x, 0.01 * x)

    bff = jnp.bfloat16
    h_ref = leaky(jnp.dot(feat.astype(bff), wf.astype(bff),
                          preferred_element_type=jnp.float32) + bf)
    z_ref = leaky(jnp.dot(feat.astype(bff), wm.astype(bff),
                          preferred_element_type=jnp.float32) + bm)
    agg_ref = jnp.dot(adj.astype(bff), h_ref.astype(bff),
                      preferred_element_type=jnp.float32)
    g_ref = jax.nn.sigmoid(beta)
    hp_ref = g_ref * z_ref + (1.0 - g_ref) * agg_ref

    assert hp.shape == (N, nhid) and beta_out.shape == (1, 1)
    assert jnp.allclose(hp, hp_ref, atol=1e-4, rtol=1e-4), "mismatch vs reference"
    assert jnp.allclose(beta_out, g_ref), "beta mismatch"

    # Also exercise the raw-adj fallback path once for coverage.
    hp2, _ = gnn_layer(feat, adj, wf, bf, wm, bm, beta)
    jax.block_until_ready(hp2)
    assert jnp.allclose(hp2, hp_ref, atol=1e-4, rtol=1e-4), "raw-adj mismatch"

    print("KERNEL_OK")
</pallas_src>

<mosaic_0001>
module attributes {stable_mosaic.version = 11 : i64} {
  func.func @gnn_layer_kernel(%arg0: i32, %arg1: i32, %arg2: memref<1x1xf32, #tpu.memory_space<smem>>, %arg3: memref<128x256xbf16, #tpu.memory_space<vmem>>, %arg4: memref<256x32xbf16, #tpu.memory_space<vmem>>, %arg5: memref<128x32xbf16, #tpu.memory_space<vmem>>, %arg6: memref<32x128xbf16, #tpu.memory_space<vmem>>, %arg7: memref<1x128xf32, #tpu.memory_space<vmem>>, %arg8: memref<32x128xbf16, #tpu.memory_space<vmem>>, %arg9: memref<1x128xf32, #tpu.memory_space<vmem>>, %arg10: memref<128x128xf32, #tpu.memory_space<vmem>>) attributes {dimension_semantics = [#tpu.dimension_semantics<parallel>, #tpu.dimension_semantics<arbitrary>], iteration_bounds = array<i64: 2, 1>, scalar_prefetch = 0 : i64, scratch_operands = 0 : i64, tpu.core_type = #tpu.core_type<tc>, window_params = [{transform_indices = @transform_0, window_bounds = array<i64: 1, 1>}, {transform_indices = @transform_1, window_bounds = array<i64: 128, 256>}, {transform_indices = @transform_2, window_bounds = array<i64: 256, 32>}, {transform_indices = @transform_3, window_bounds = array<i64: 128, 32>}, {pipeline_mode = #tpu.pipeline_mode<synchronous>, transform_indices = @transform_4, window_bounds = array<i64: 32, 128>}, {pipeline_mode = #tpu.pipeline_mode<synchronous>, transform_indices = @transform_5, window_bounds = array<i64: 1, 128>}, {pipeline_mode = #tpu.pipeline_mode<synchronous>, transform_indices = @transform_6, window_bounds = array<i64: 32, 128>}, {pipeline_mode = #tpu.pipeline_mode<synchronous>, transform_indices = @transform_7, window_bounds = array<i64: 1, 128>}, {transform_indices = @transform_8, window_bounds = array<i64: 128, 128>}]} {
    %c0_i32 = arith.constant 0 : i32
    %0 = arith.cmpi eq, %arg1, %c0_i32 : i32
    %1 = arith.extui %0 : i1 to i32
    %c0_i32_0 = arith.constant 0 : i32
    %2 = arith.cmpi ne, %1, %c0_i32_0 : i32
    scf.if %2 {
      %cst_17 = arith.constant 0.000000e+00 : f32
      %23 = vector.broadcast %cst_17 : f32 to vector<128x128xf32>
      %c0_18 = arith.constant 0 : index
      %c0_19 = arith.constant 0 : index
      %24 = vector.load %arg10[%c0_18, %c0_19] : memref<128x128xf32, #tpu.memory_space<vmem>>, vector<128x128xf32>
      tpu.vector_store %arg10[%c0_18, %c0_19], %23 {strides = array<i32>} : memref<128x128xf32, #tpu.memory_space<vmem>>, vector<128x128xf32>,
    } else {
    }
    %c0 = arith.constant 0 : index
    %c0_1 = arith.constant 0 : index
    %3 = vector.load %arg4[%c0, %c0_1] : memref<256x32xbf16, #tpu.memory_space<vmem>>, vector<256x32xbf16>
    %c0_2 = arith.constant 0 : index
    %c0_3 = arith.constant 0 : index
    %4 = vector.load %arg6[%c0_2, %c0_3] : memref<32x128xbf16, #tpu.memory_space<vmem>>, vector<32x128xbf16>
    %cst = arith.constant dense<0.000000e+00> : vector<256x128xf32>
    %5 = tpu.matmul %3, %4, %cst {dimension_numbers = #tpu.dot_dimension_numbers<[1], [0], [0], [1], [0, 0, 1, 1], [], []>} : vector<256x32xbf16>, vector<32x128xbf16>, vector<256x128xf32> -> vector<256x128xf32>
    %c0_4 = arith.constant 0 : index
    %c0_5 = arith.constant 0 : index
    %6 = vector.load %arg7[%c0_4, %c0_5] : memref<1x128xf32, #tpu.memory_space<vmem>>, vector<1x128xf32>
    %7 = vector.broadcast %6 : vector<1x128xf32> to vector<256x128xf32>
    %8 = arith.addf %5, %7 : vector<256x128xf32>
    %cst_6 = arith.constant 0.000000e+00 : f32
    %9 = vector.broadcast %cst_6 : f32 to vector<256x128xf32>
    %10 = arith.cmpf ogt, %8, %9 : vector<256x128xf32>
    %cst_7 = arith.constant 0.00999999977 : f32
    %11 = vector.broadcast %cst_7 : f32 to vector<256x128xf32>
    %12 = arith.mulf %11, %8 : vector<256x128xf32>
    %13 = arith.select %10, %8, %12 : vector<256x128xi1>, vector<256x128xf32>
    %c0_8 = arith.constant 0 : index
    %c0_9 = arith.constant 0 : index
    %14 = vector.load %arg10[%c0_8, %c0_9] : memref<128x128xf32, #tpu.memory_space<vmem>>, vector<128x128xf32>
    %c0_10 = arith.constant 0 : index
    %c0_11 = arith.constant 0 : index
    %15 = vector.load %arg3[%c0_10, %c0_11] : memref<128x256xbf16, #tpu.memory_space<vmem>>, vector<128x256xbf16>
    %16 = arith.truncf %13 : vector<256x128xf32> to vector<256x128xbf16>
    %cst_12 = arith.constant dense<0.000000e+00> : vector<128x128xf32>
    %17 = tpu.matmul %15, %16, %cst_12 {dimension_numbers = #tpu.dot_dimension_numbers<[1], [0], [0], [1], [0, 0, 1, 1], [], []>} : vector<128x256xbf16>, vector<256x128xbf16>, vector<128x128xf32> -> vector<128x128xf32>
    %18 = arith.addf %14, %17 : vector<128x128xf32>
    %c0_13 = arith.constant 0 : index
    %c0_14 = arith.constant 0 : index
    %19 = vector.load %arg10[%c0_13, %c0_14] : memref<128x128xf32, #tpu.memory_space<vmem>>, vector<128x128xf32>
    tpu.vector_store %arg10[%c0_13, %c0_14], %18 {strides = array<i32>} : memref<128x128xf32, #tpu.memory_space<vmem>>, vector<128x128xf32>,
    %c0_i32_15 = arith.constant 0 : i32
    %20 = arith.cmpi eq, %arg1, %c0_i32_15 : i32
    %21 = arith.extui %20 : i1 to i32
    %c0_i32_16 = arith.constant 0 : i32
    %22 = arith.cmpi ne, %21, %c0_i32_16 : i32
    scf.if %22 {
      %c0_17 = arith.constant 0 : index
      %c0_18 = arith.constant 0 : index
      %23 = vector.load %arg5[%c0_17, %c0_18] : memref<128x32xbf16, #tpu.memory_space<vmem>>, vector<128x32xbf16>
      %c0_19 = arith.constant 0 : index
      %c0_20 = arith.constant 0 : index
      %24 = vector.load %arg8[%c0_19, %c0_20] : memref<32x128xbf16, #tpu.memory_space<vmem>>, vector<32x128xbf16>
      %cst_21 = arith.constant dense<0.000000e+00> : vector<128x128xf32>
      %25 = tpu.matmul %23, %24, %cst_21 {dimension_numbers = #tpu.dot_dimension_numbers<[1], [0], [0], [1], [0, 0, 1, 1], [], []>} : vector<128x32xbf16>, vector<32x128xbf16>, vector<128x128xf32> -> vector<128x128xf32>
      %c0_22 = arith.constant 0 : index
      %c0_23 = arith.constant 0 : index
      %26 = vector.load %arg9[%c0_22, %c0_23] : memref<1x128xf32, #tpu.memory_space<vmem>>, vector<1x128xf32>
      %27 = vector.broadcast %26 : vector<1x128xf32> to vector<128x128xf32>
      %28 = arith.addf %25, %27 : vector<128x128xf32>
      %cst_24 = arith.constant 0.000000e+00 : f32
      %29 = vector.broadcast %cst_24 : f32 to vector<128x128xf32>
      %30 = arith.cmpf ogt, %28, %29 : vector<128x128xf32>
      %cst_25 = arith.constant 0.00999999977 : f32
      %31 = vector.broadcast %cst_25 : f32 to vector<128x128xf32>
      %32 = arith.mulf %31, %28 : vector<128x128xf32>
      %33 = arith.select %30, %28, %32 : vector<128x128xi1>, vector<128x128xf32>
      %c0_26 = arith.constant 0 : index
      %c0_27 = arith.constant 0 : index
      %34 = memref.load %arg2[%c0_26, %c0_27] : memref<1x1xf32, #tpu.memory_space<smem>>
      %35 = vector.broadcast %34 : f32 to vector<128x128xf32>
      %36 = arith.mulf %35, %33 : vector<128x128xf32>
      %cst_28 = arith.constant 1.000000e+00 : f32
      %37 = arith.subf %cst_28, %34 : f32
      %c0_29 = arith.constant 0 : index
      %c0_30 = arith.constant 0 : index
      %38 = vector.load %arg10[%c0_29, %c0_30] : memref<128x128xf32, #tpu.memory_space<vmem>>, vector<128x128xf32>
      %39 = vector.broadcast %37 : f32 to vector<128x128xf32>
      %40 = arith.mulf %39, %38 : vector<128x128xf32>
      %41 = arith.addf %36, %40 : vector<128x128xf32>
      %c0_31 = arith.constant 0 : index
      %c0_32 = arith.constant 0 : index
      %42 = vector.load %arg10[%c0_31, %c0_32] : memref<128x128xf32, #tpu.memory_space<vmem>>, vector<128x128xf32>
      tpu.vector_store %arg10[%c0_31, %c0_32], %41 {strides = array<i32>} : memref<128x128xf32, #tpu.memory_space<vmem>>, vector<128x128xf32>,
    } else {
    }
    return
  }
  func.func @transform_0(%arg0: i32, %arg1: i32) -> (i32, i32) {
    %c0_i32 = arith.constant 0 : i32
    %c0_i32_0 = arith.constant 0 : i32
    %c0_i32_1 = arith.constant 0 : i32
    return %c0_i32, %c0_i32_0 : i32, i32
  }
  func.func @transform_1(%arg0: i32, %arg1: i32) -> (i32, i32) {
    %c0_i32 = arith.constant 0 : i32
    return %arg0, %arg1 : i32, i32
  }
  func.func @transform_2(%arg0: i32, %arg1: i32) -> (i32, i32) {
    %c0_i32 = arith.constant 0 : i32
    %c0_i32_0 = arith.constant 0 : i32
    return %arg1, %c0_i32 : i32, i32
  }
  func.func @transform_3(%arg0: i32, %arg1: i32) -> (i32, i32) {
    %c0_i32 = arith.constant 0 : i32
    %c0_i32_0 = arith.constant 0 : i32
    return %arg0, %c0_i32 : i32, i32
  }
  func.func @transform_4(%arg0: i32, %arg1: i32) -> (i32, i32) {
    %c0_i32 = arith.constant 0 : i32
    %c0_i32_0 = arith.constant 0 : i32
    %c0_i32_1 = arith.constant 0 : i32
    return %c0_i32, %c0_i32_0 : i32, i32
  }
  func.func @transform_5(%arg0: i32, %arg1: i32) -> (i32, i32) {
    %c0_i32 = arith.constant 0 : i32
    %c0_i32_0 = arith.constant 0 : i32
    %c0_i32_1 = arith.constant 0 : i32
    return %c0_i32, %c0_i32_0 : i32, i32
  }
  func.func @transform_6(%arg0: i32, %arg1: i32) -> (i32, i32) {
    %c0_i32 = arith.constant 0 : i32
    %c0_i32_0 = arith.constant 0 : i32
    %c0_i32_1 = arith.constant 0 : i32
    return %c0_i32, %c0_i32_0 : i32, i32
  }
  func.func @transform_7(%arg0: i32, %arg1: i32) -> (i32, i32) {
    %c0_i32 = arith.constant 0 : i32
    %c0_i32_0 = arith.constant 0 : i32
    %c0_i32_1 = arith.constant 0 : i32
    return %c0_i32, %c0_i32_0 : i32, i32
  }
  func.func @transform_8(%arg0: i32, %arg1: i32) -> (i32, i32) {
    %c0_i32 = arith.constant 0 : i32
    %c0_i32_0 = arith.constant 0 : i32
    return %arg0, %c0_i32 : i32, i32
  }
}

</mosaic_0001>

<llo_original>
// kernel: tpu_custom_call.1
$region0: #{tpu_custom_call.1}
  #allocation0 [shape = 'u32[]', space=smem, size = 0x4, offset = 0x4, fixed_abs, tag = 'smem constant byte address 0x4 - core index']
  #allocation1 [shape = 'u32[72,128]{1,0:T(1,128)}', space=vmem, size = 0x9000, scoped, tag = 'internal scratch']
  #allocation2 [shape = 'f32[1,1]{1,0:T(1,128)S(6)}', space=smem, size = 0x200, scoped, tag = 'scoped memory for tpu_custom_call.1']
  %s0 = inlined_call_operand.<no memory space> [shape: f32[1,1], index: 0, kind: input, shape index: {}]
  %s1 = inlined_call_operand.vmem [shape: bf16[256,256], index: 1, kind: input, shape index: {}]
  %s2 = inlined_call_operand.vmem [shape: bf16[256,32], index: 2, kind: input, shape index: {}]
  %s3 = inlined_call_operand.vmem [shape: bf16[256,32], index: 3, kind: input, shape index: {}]
  %s4 = inlined_call_operand.vmem [shape: bf16[32,128], index: 4, kind: input, shape index: {}]
  %s5 = inlined_call_operand.vmem [shape: f32[1,128], index: 5, kind: input, shape index: {}]
  %s6 = inlined_call_operand.vmem [shape: bf16[32,128], index: 6, kind: input, shape index: {}]
  %s7 = inlined_call_operand.vmem [shape: f32[1,128], index: 7, kind: input, shape index: {}]
  %s8 = inlined_call_operand.hbm [shape: f32[256,128], index: 8, kind: output, shape index: {}]
  %s9 = sld [smem:[#allocation0]]
  $region73: #{tpu_custom_call.1} parent=0
    _
  %s11 = ssub.s32 1, %s9
  %s12 = scalar_select 0, %s11, %s9
  %13 = sst [smem:[#allocation2]] %s0
  $region1: #{tpu_custom_call.1} parent=0
    #allocation3 [shape = 'u8[131072]{0}', space=vmem, size = 0x20000, scoped, tag = 'output window, operand 0']
    #allocation4 [shape = 's32[2]{0}', space=sflag, size = 0x8, scoped, tag = 'scoped memory for tpu_custom_call.1']
    %14 = vsyncpa [#allocation4], 0
    %s15 = scalar_lea.sflag [#allocation4], 1
    %16 = vsyncpa %s15, 0
    loop: start=0, step=1, limit=4
    $region2: #{tpu_custom_call.1} parent=1 // loop_pre_header
      _
    $region3: #{tpu_custom_call.1} parent=1 // loop_header
      %s18 = sphi 0, %s22
      %p19 = scmp.ge.s32.totalorder %s18, 4
      %s25 = sphi 0, %s37
      %s26 = sphi 0, %s33
      %s27 = sphi 0, %s25
      %s28 = sphi 0, %s26
      %s29 = sphi 0, %s27
      %s30 = sphi 0, %s28
      %s38 = sphi 0, %s38
      %s40 = sphi 0, %s38
      %s41 = sphi 0, %s40
      %s55 = sphi 0, %s41
      %s63 = sphi 0, %s65
      %s66 = sphi 0, %s63
      %s67 = sphi 0, %s66
      %s83 = sphi 0, %s67
      %s89 = sphi 0, %s91
      %s92 = sphi 0, %s89
      %s93 = sphi 0, %s92
      %s109 = sphi 0, %s93
      %s115 = sphi 0, %s117
      %s118 = sphi 0, %s115
      %s119 = sphi 0, %s118
      %s135 = sphi 0, %s119
      %s139 = sphi 0, %s139
      %s141 = sphi 0, %s139
      %s142 = sphi 0, %s141
      %s156 = sphi 0, %s142
      %s160 = sphi 0, %s160
      %s162 = sphi 0, %s160
      %s163 = sphi 0, %s162
      %s177 = sphi 0, %s163
      %s181 = sphi 0, %s181
      %s183 = sphi 0, %s181
      %s184 = sphi 0, %s183
      %s198 = sphi 0, %s184
      %s202 = sphi 0, %s202
      %s204 = sphi 0, %s202
      %s205 = sphi 0, %s204
      %s219 = sphi 0, %s205
      %s225 = sphi 0, %s227
      %s228 = sphi 0, %s225
      %s229 = sphi 0, %s228
      %s245 = sphi 0, %s229
    $region4: #{tpu_custom_call.1} parent=1 // loop_header_branch
      %21 = sbr.rel (%p19) target = $region8
    $region5: #{tpu_custom_call.1} parent=1 // loop_body
      %s23 = ssub.s32 %s18, 1
      %s24 = ssub.s32 %s18, 2
      %s31 = sadd.s32 1, %s26
      %p32 = scmp.ge.s32.totalorder %s31, 1
      %s33 = scalar_select %p32, 0, %s31
      %s34 = sadd.s32 1, %s25
      %s35 = scalar_select %p32, %s34, %s25
      %p36 = scmp.ge.s32.totalorder %s35, 2
      %s37 = scalar_select %p36, 0, %s35
      %s39 = sadd.s32 %s38, 1
      %p42 = scmp.eq.s32.totalorder %s18, 1
      %p43 = scmp.ne.s32.totalorder %s38, %s40
      %p44 = scmp.eq.s32.totalorder %s18, 0
      %p45 = por %p43, %p44
      %p46 = scmp.ne.s32.totalorder %s38, %s40
      %p47 = scmp.eq.s32.totalorder %s23, 1
      %p48 = por %p46, %p47
      %p49 = scmp.ne.s32.totalorder %s40, %s41
      %p50 = scmp.eq.s32.totalorder %s23, 0
      %p51 = por %p49, %p50
      %p52 = scmp.ne.s32.totalorder %s40, %s41
      %p53 = scmp.eq.s32.totalorder %s24, 1
      %p54 = por %p52, %p53
      %p56 = scmp.ne.s32.totalorder %s41, %s55
      %p57 = scmp.eq.s32.totalorder %s24, 0
      %p58 = por %p56, %p57
      %s59 = ssub.s32 %s25, %s37
      %s60 = ssub.s32 %s26, %s33
      %s61 = sor.u32 %s59, %s60
      %p62 = scmp.eq.s32.totalorder %s61, 0
      %s64 = sadd.s32 %s63, 1
      %s65 = scalar_select %p62, %s63, %s64
      %p68 = pneg %p62
      %p69 = scmp.eq.s32.totalorder %s18, 1
      %p70 = por %p68, %p69
      %p71 = scmp.ne.s32.totalorder %s63, %s66
      %p72 = scmp.eq.s32.totalorder %s18, 0
      %p73 = por %p71, %p72
      %p74 = scmp.ne.s32.totalorder %s63, %s66
      %p75 = scmp.eq.s32.totalorder %s23, 1
      %p76 = por %p74, %p75
      %p77 = scmp.ne.s32.totalorder %s66, %s67
      %p78 = scmp.eq.s32.totalorder %s23, 0
      %p79 = por %p77, %p78
      %p80 = scmp.ne.s32.totalorder %s66, %s67
      %p81 = scmp.eq.s32.totalorder %s24, 1
      %p82 = por %p80, %p81
      %p84 = scmp.ne.s32.totalorder %s67, %s83
      %p85 = scmp.eq.s32.totalorder %s24, 0
      %p86 = por %p84, %p85
      %s87 = ssub.s32 %s26, %s33
      %p88 = scmp.eq.s32.totalorder %s87, 0
      %s90 = sadd.s32 %s89, 1
      %s91 = scalar_select %p88, %s89, %s90
      %p94 = pneg %p88
      %p95 = scmp.eq.s32.totalorder %s18, 1
      %p96 = por %p94, %p95
      %p97 = scmp.ne.s32.totalorder %s89, %s92
      %p98 = scmp.eq.s32.totalorder %s18, 0
      %p99 = por %p97, %p98
      %p100 = scmp.ne.s32.totalorder %s89, %s92
      %p101 = scmp.eq.s32.totalorder %s23, 1
      %p102 = por %p100, %p101
      %p103 = scmp.ne.s32.totalorder %s92, %s93
      %p104 = scmp.eq.s32.totalorder %s23, 0
      %p105 = por %p103, %p104
      %p106 = scmp.ne.s32.totalorder %s92, %s93
      %p107 = scmp.eq.s32.totalorder %s24, 1
      %p108 = por %p106, %p107
      %p110 = scmp.ne.s32.totalorder %s93, %s109
      %p111 = scmp.eq.s32.totalorder %s24, 0
      %p112 = por %p110, %p111
      %s113 = ssub.s32 %s25, %s37
      %p114 = scmp.eq.s32.totalorder %s113, 0
      %s116 = sadd.s32 %s115, 1
      %s117 = scalar_select %p114, %s115, %s116
      %p120 = pneg %p114
      %p121 = scmp.eq.s32.totalorder %s18, 1
      %p122 = por %p120, %p121
      %p123 = scmp.ne.s32.totalorder %s115, %s118
      %p124 = scmp.eq.s32.totalorder %s18, 0
      %p125 = por %p123, %p124
      %p126 = scmp.ne.s32.totalorder %s115, %s118
      %p127 = scmp.eq.s32.totalorder %s23, 1
      %p128 = por %p126, %p127
      %p129 = scmp.ne.s32.totalorder %s118, %s119
      %p130 = scmp.eq.s32.totalorder %s23, 0
      %p131 = por %p129, %p130
      %p132 = scmp.ne.s32.totalorder %s118, %s119
      %p133 = scmp.eq.s32.totalorder %s24, 1
      %p134 = por %p132, %p133
      %p136 = scmp.ne.s32.totalorder %s119, %s135
      %p137 = scmp.eq.s32.totalorder %s24, 0
      %p138 = por %p136, %p137
      %s140 = sadd.s32 %s139, 1
      %p143 = scmp.eq.s32.totalorder %s18, 1
      %p144 = scmp.ne.s32.totalorder %s139, %s141
      %p145 = scmp.eq.s32.totalorder %s18, 0
      %p146 = por %p144, %p145
      %p147 = scmp.ne.s32.totalorder %s139, %s141
      %p148 = scmp.eq.s32.totalorder %s23, 1
      %p149 = por %p147, %p148
      %p150 = scmp.ne.s32.totalorder %s141, %s142
      %p151 = scmp.eq.s32.totalorder %s23, 0
      %p152 = por %p150, %p151
      %p153 = scmp.ne.s32.totalorder %s141, %s142
      %p154 = scmp.eq.s32.totalorder %s24, 1
      %p155 = por %p153, %p154
      %p157 = scmp.ne.s32.totalorder %s142, %s156
      %p158 = scmp.eq.s32.totalorder %s24, 0
      %p159 = por %p157, %p158
      %s161 = sadd.s32 %s160, 1
      %p164 = scmp.eq.s32.totalorder %s18, 1
      %p165 = scmp.ne.s32.totalorder %s160, %s162
      %p166 = scmp.eq.s32.totalorder %s18, 0
      %p167 = por %p165, %p166
      %p168 = scmp.ne.s32.totalorder %s160, %s162
      %p169 = scmp.eq.s32.totalorder %s23, 1
      %p170 = por %p168, %p169
      %p171 = scmp.ne.s32.totalorder %s162, %s163
      %p172 = scmp.eq.s32.totalorder %s23, 0
      %p173 = por %p171, %p172
      %p174 = scmp.ne.s32.totalorder %s162, %s163
      %p175 = scmp.eq.s32.totalorder %s24, 1
      %p176 = por %p174, %p175
      %p178 = scmp.ne.s32.totalorder %s163, %s177
      %p179 = scmp.eq.s32.totalorder %s24, 0
      %p180 = por %p178, %p179
      %s182 = sadd.s32 %s181, 1
      %p185 = scmp.eq.s32.totalorder %s18, 1
      %p186 = scmp.ne.s32.totalorder %s181, %s183
      %p187 = scmp.eq.s32.totalorder %s18, 0
      %p188 = por %p186, %p187
      %p189 = scmp.ne.s32.totalorder %s181, %s183
      %p190 = scmp.eq.s32.totalorder %s23, 1
      %p191 = por %p189, %p190
      %p192 = scmp.ne.s32.totalorder %s183, %s184
      %p193 = scmp.eq.s32.totalorder %s23, 0
      %p194 = por %p192, %p193
      %p195 = scmp.ne.s32.totalorder %s183, %s184
      %p196 = scmp.eq.s32.totalorder %s24, 1
      %p197 = por %p195, %p196
      %p199 = scmp.ne.s32.totalorder %s184, %s198
      %p200 = scmp.eq.s32.totalorder %s24, 0
      %p201 = por %p199, %p200
      %s203 = sadd.s32 %s202, 1
      %p206 = scmp.eq.s32.totalorder %s18, 1
      %p207 = scmp.ne.s32.totalorder %s202, %s204
      %p208 = scmp.eq.s32.totalorder %s18, 0
      %p209 = por %p207, %p208
      %p210 = scmp.ne.s32.totalorder %s202, %s204
      %p211 = scmp.eq.s32.totalorder %s23, 1
      %p212 = por %p210, %p211
      %p213 = scmp.ne.s32.totalorder %s204, %s205
      %p214 = scmp.eq.s32.totalorder %s23, 0
      %p215 = por %p213, %p214
      %p216 = scmp.ne.s32.totalorder %s204, %s205
      %p217 = scmp.eq.s32.totalorder %s24, 1
      %p218 = por %p216, %p217
      %p220 = scmp.ne.s32.totalorder %s205, %s219
      %p221 = scmp.eq.s32.totalorder %s24, 0
      %p222 = por %p220, %p221
      %s223 = ssub.s32 %s25, %s37
      %p224 = scmp.eq.s32.totalorder %s223, 0
      %s226 = sadd.s32 %s225, 1
      %s227 = scalar_select %p224, %s225, %s226
      %p230 = pneg %p224
      %p231 = scmp.eq.s32.totalorder %s18, 1
      %p232 = por %p230, %p231
      %p233 = scmp.ne.s32.totalorder %s225, %s228
      %p234 = scmp.eq.s32.totalorder %s18, 0
      %p235 = por %p233, %p234
      %p236 = scmp.ne.s32.totalorder %s225, %s228
      %p237 = scmp.eq.s32.totalorder %s23, 1
      %p238 = por %p236, %p237
      %p239 = scmp.ne.s32.totalorder %s228, %s229
      %p240 = scmp.eq.s32.totalorder %s23, 0
      %p241 = por %p239, %p240
      %p242 = scmp.ne.s32.totalorder %s228, %s229
      %p243 = scmp.eq.s32.totalorder %s24, 1
      %p244 = por %p242, %p243
      %p246 = scmp.ne.s32.totalorder %s229, %s245
      %p247 = scmp.eq.s32.totalorder %s24, 0
      %p248 = por %p246, %p247
      %p249 = scmp.le.s32.totalorder 1, %s18
      %p250 = scmp.lt.s32.totalorder %s18, 3
      %p251 = pnand %p249, %p250
      %p252 = pneg %p251
      // Predicated region
      $region9: #{tpu_custom_call.1} parent=5 // pred_check
        _
      $region10: #{tpu_custom_call.1} parent=5 // pred_check_branch
        %254 = sbr.rel (%p251) target = $region12
      $region11: #{tpu_custom_call.1} parent=5 // pred_region
        %s255 = ssub.s32 %s18, 1
        // Predicated region
        $region13: #{tpu_custom_call.1} parent=11 // pred_check
          %p256 = pneg %p51
        $region14: #{tpu_custom_call.1} parent=11 // pred_check_branch
          %258 = sbr.rel (%p256) target = $region16
        $region15: #{tpu_custom_call.1} parent=11 // pred_region
          _
        $region16: #{tpu_custom_call.1} parent=11 // pred_fallthru
          _
        // Predicated region
        $region17: #{tpu_custom_call.1} parent=11 // pred_check
          %p259 = pneg %p105
        $region18: #{tpu_custom_call.1} parent=11 // pred_check_branch
          %261 = sbr.rel (%p259) target = $region20
        $region19: #{tpu_custom_call.1} parent=11 // pred_region
          %s262 = smul.u32 32, %s28
          %p263 = scmp.lt.s32.totalorder %s262, 31
          %s264 = scalar_select %p263, %s262, 31
          %s265 = smul.addr %s264, 4
          %s266 = scalar_lea.vmem %s2, %s265
          %s267 = smul.u32 32, %s28
        $region20: #{tpu_custom_call.1} parent=11 // pred_fallthru
          _
        // Predicated region
        $region21: #{tpu_custom_call.1} parent=11 // pred_check
          %p268 = pneg %p152
        $region22: #{tpu_custom_call.1} parent=11 // pred_check_branch
          %270 = sbr.rel (%p268) target = $region24
        $region23: #{tpu_custom_call.1} parent=11 // pred_region
          _
        $region24: #{tpu_custom_call.1} parent=11 // pred_fallthru
          _
        // Predicated region
        $region25: #{tpu_custom_call.1} parent=11 // pred_check
          %p271 = pneg %p173
        $region26: #{tpu_custom_call.1} parent=11 // pred_check_branch
          %273 = sbr.rel (%p271) target = $region28
        $region27: #{tpu_custom_call.1} parent=11 // pred_region
          _
        $region28: #{tpu_custom_call.1} parent=11 // pred_fallthru
          _
        // Predicated region
        $region29: #{tpu_custom_call.1} parent=11 // pred_check
          %p274 = pneg %p194
        $region30: #{tpu_custom_call.1} parent=11 // pred_check_branch
          %276 = sbr.rel (%p274) target = $region32
        $region31: #{tpu_custom_call.1} parent=11 // pred_region
          _
        $region32: #{tpu_custom_call.1} parent=11 // pred_fallthru
          _
        // Predicated region
        $region33: #{tpu_custom_call.1} parent=11 // pred_check
          %p277 = pneg %p215
        $region34: #{tpu_custom_call.1} parent=11 // pred_check_branch
          %279 = sbr.rel (%p277) target = $region36
        $region35: #{tpu_custom_call.1} parent=11 // pred_region
          _
        $region36: #{tpu_custom_call.1} parent=11 // pred_fallthru
          _
      $region12: #{tpu_custom_call.1} parent=5 // pred_fallthru
        _
      %p280 = scmp.lt.s32.totalorder %s18, 2
      // Predicated region
      $region37: #{tpu_custom_call.1} parent=5 // pred_check
        %p281 = pneg %p280
      $region38: #{tpu_custom_call.1} parent=5 // pred_check_branch
        %283 = sbr.rel (%p281) target = $region40
      $region39: #{tpu_custom_call.1} parent=5 // pred_region
        // Predicated region
        $region41: #{tpu_custom_call.1} parent=39 // pred_check
          %p284 = pneg %p73
        $region42: #{tpu_custom_call.1} parent=39 // pred_check_branch
          %286 = sbr.rel (%p284) target = $region44
        $region43: #{tpu_custom_call.1} parent=39 // pred_region
          %s287 = smul.u32 16, %s25
          %s288 = smul.u32 2, %s26
          %p289 = scmp.lt.s32.totalorder %s287, 31
          %s290 = scalar_select %p289, %s287, 31
          %p291 = scmp.lt.s32.totalorder %s288, 1
          %s292 = scalar_select %p291, %s288, 1
          %s293 = smul.addr %s290, 2
          %s294 = sadd.s32 %s292, %s293
          %s295 = smul.addr %s294, 4
          %s296 = scalar_lea.vmem %s1, %s295
          %s297 = smul.u32 16, %s25
          %s298 = smul.u32 2, %s26
        $region44: #{tpu_custom_call.1} parent=39 // pred_fallthru
          _
        // Predicated region
        $region45: #{tpu_custom_call.1} parent=39 // pred_check
          %p299 = pneg %p125
        $region46: #{tpu_custom_call.1} parent=39 // pred_check_branch
          %301 = sbr.rel (%p299) target = $region48
        $region47: #{tpu_custom_call.1} parent=39 // pred_region
          %s302 = smul.u32 16, %s25
          %p303 = scmp.lt.s32.totalorder %s302, 31
          %s304 = scalar_select %p303, %s302, 31
          %s305 = smul.addr %s304, 4
          %s306 = scalar_lea.vmem %s3, %s305
          %s307 = smul.u32 16, %s25
        $region48: #{tpu_custom_call.1} parent=39 // pred_fallthru
          _
      $region40: #{tpu_custom_call.1} parent=5 // pred_fallthru
        _
      %p308 = scmp.le.s32.totalorder 1, %s18
      %p309 = scmp.lt.s32.totalorder %s18, 3
      %p310 = pnand %p308, %p309
      %p311 = pneg %p310
      // Predicated region
      $region49: #{tpu_custom_call.1} parent=5 // pred_check
        _
      $region50: #{tpu_custom_call.1} parent=5 // pred_check_branch
        %313 = sbr.rel (%p310) target = $region52
      $region51: #{tpu_custom_call.1} parent=5 // pred_region
        %s314 = ssub.s32 %s18, 1
        %p315 = pneg %p51
        %p316 = pneg %p48
        %s317 = smul.u32 16, %s27
        %s318 = smul.u32 2, %s28
        %p319 = scmp.lt.s32.totalorder %s317, 31
        %s320 = scalar_select %p319, %s317, 31
        %p321 = scmp.lt.s32.totalorder %s318, 1
        %s322 = scalar_select %p321, %s318, 1
        %s323 = smul.addr %s320, 2
        %s324 = sadd.s32 %s322, %s323
        %s325 = smul.addr %s324, 4
        %s326 = scalar_lea.vmem %s1, %s325
        %p327 = pneg %p79
        %p328 = pneg %p76
        %s329 = smul.u32 32, %s28
        %p330 = scmp.lt.s32.totalorder %s329, 31
        %s331 = scalar_select %p330, %s329, 31
        %s332 = smul.addr %s331, 4
        %s333 = scalar_lea.vmem %s2, %s332
        %p334 = pneg %p105
        %p335 = pneg %p102
        %s336 = smul.u32 16, %s27
        %p337 = scmp.lt.s32.totalorder %s336, 31
        %s338 = scalar_select %p337, %s336, 31
        %s339 = smul.addr %s338, 4
        %s340 = scalar_lea.vmem %s3, %s339
        %p341 = pneg %p131
        %p342 = pneg %p128
        %p343 = pneg %p152
        %p344 = pneg %p149
        %p345 = pneg %p173
        %p346 = pneg %p170
        %p347 = pneg %p194
        %p348 = pneg %p191
        %p349 = pneg %p215
        %p350 = pneg %p212
        %p351 = pneg %p241
        %p352 = pneg %p238
        %s353 = sand.u32 %s228, 1
        %s354 = scalar_lea.sflag [#allocation4], %s353
        %s355 = sand.u32 %s228, 1
        %s356 = smul.addr %s355, 128
        %s357 = scalar_lea.vmem [#allocation3], %s356
        %s358 = smul.u32 16, %s27
        %s359 = smul.u32 2, %s28
        %p360 = scmp.lt.s32.totalorder %s358, 31
        %s361 = scalar_select %p360, %s358, 31
        %p362 = scmp.lt.s32.totalorder %s359, 1
        %s363 = scalar_select %p362, %s359, 1
        %s364 = smul.addr %s361, 2
        %s365 = sadd.s32 %s363, %s364
        %s366 = smul.addr %s365, 4
        %s367 = scalar_lea.vmem %s1, %s366
        %s368 = smul.u32 16, %s27
        %s369 = smul.u32 2, %s28
        %s370 = smul.u32 32, %s28
        %p371 = scmp.lt.s32.totalorder %s370, 31
        %s372 = scalar_select %p371, %s370, 31
        %s373 = smul.addr %s372, 4
        %s374 = scalar_lea.vmem %s2, %s373
        %s375 = smul.u32 32, %s28
        %s376 = smul.u32 16, %s27
        %p377 = scmp.lt.s32.totalorder %s376, 31
        %s378 = scalar_select %p377, %s376, 31
        %s379 = smul.addr %s378, 4
        %s380 = scalar_lea.vmem %s3, %s379
        %s381 = smul.u32 16, %s27
        %s382 = smul.u32 16, %s27
        %p384 = scmp.eq.s32.totalorder %s28, 0
        // Predicated region
        $region53: #{tpu_custom_call.1} parent=51 // pred_check
          %p385 = pneg %p384
        $region54: #{tpu_custom_call.1} parent=51 // pred_check_branch
          %387 = sbr.rel (%p385) target = $region56
        $region55: #{tpu_custom_call.1} parent=51 // pred_region
          %388 = vst [vmem:[%s357] sm:$0xff] 0.0
          %389 = vst [vmem:[%s357 + $0x8] sm:$0xff] 0.0
          %390 = vst [vmem:[%s357 + $0x10] sm:$0xff] 0.0
          %391 = vst [vmem:[%s357 + $0x18] sm:$0xff] 0.0
          %392 = vst [vmem:[%s357 + $0x20] sm:$0xff] 0.0
          %393 = vst [vmem:[%s357 + $0x28] sm:$0xff] 0.0
          %394 = vst [vmem:[%s357 + $0x30] sm:$0xff] 0.0
          %395 = vst [vmem:[%s357 + $0x38] sm:$0xff] 0.0
          %396 = vst [vmem:[%s357 + $0x40] sm:$0xff] 0.0
          %397 = vst [vmem:[%s357 + $0x48] sm:$0xff] 0.0
          %398 = vst [vmem:[%s357 + $0x50] sm:$0xff] 0.0
          %399 = vst [vmem:[%s357 + $0x58] sm:$0xff] 0.0
          %400 = vst [vmem:[%s357 + $0x60] sm:$0xff] 0.0
          %401 = vst [vmem:[%s357 + $0x68] sm:$0xff] 0.0
          %402 = vst [vmem:[%s357 + $0x70] sm:$0xff] 0.0
          %403 = vst [vmem:[%s357 + $0x78] sm:$0xff] 0.0
        $region56: #{tpu_custom_call.1} parent=51 // pred_fallthru
          _
        %v404 = vld [vmem:[%s374] sm:$0xf]
        %v405 = vld [vmem:[%s374 + $0x4] sm:$0xf]
        %v406 = vld [vmem:[%s374 + $0x8] sm:$0xf]
        %v407 = vld [vmem:[%s374 + $0xc] sm:$0xf]
        %v408 = vld [vmem:[%s374 + $0x10] sm:$0xf]
        %v409 = vld [vmem:[%s374 + $0x14] sm:$0xf]
        %v410 = vld [vmem:[%s374 + $0x18] sm:$0xf]
        %v411 = vld [vmem:[%s374 + $0x1c] sm:$0xf]
        %v412 = vld [vmem:[%s374 + $0x20] sm:$0xf]
        %v413 = vld [vmem:[%s374 + $0x24] sm:$0xf]
        %v414 = vld [vmem:[%s374 + $0x28] sm:$0xf]
        %v415 = vld [vmem:[%s374 + $0x2c] sm:$0xf]
        %v416 = vld [vmem:[%s374 + $0x30] sm:$0xf]
        %v417 = vld [vmem:[%s374 + $0x34] sm:$0xf]
        %v418 = vld [vmem:[%s374 + $0x38] sm:$0xf]
        %v419 = vld [vmem:[%s374 + $0x3c] sm:$0xf]
        %v420 = vld [vmem:[%s374 + $0x40] sm:$0xf]
        %v421 = vld [vmem:[%s374 + $0x44] sm:$0xf]
        %v422 = vld [vmem:[%s374 + $0x48] sm:$0xf]
        %v423 = vld [vmem:[%s374 + $0x4c] sm:$0xf]
        %v424 = vld [vmem:[%s374 + $0x50] sm:$0xf]
        %v425 = vld [vmem:[%s374 + $0x54] sm:$0xf]
        %v426 = vld [vmem:[%s374 + $0x58] sm:$0xf]
        %v427 = vld [vmem:[%s374 + $0x5c] sm:$0xf]
        %v428 = vld [vmem:[%s374 + $0x60] sm:$0xf]
        %v429 = vld [vmem:[%s374 + $0x64] sm:$0xf]
        %v430 = vld [vmem:[%s374 + $0x68] sm:$0xf]
        %v431 = vld [vmem:[%s374 + $0x6c] sm:$0xf]
        %v432 = vld [vmem:[%s374 + $0x70] sm:$0xf]
        %v433 = vld [vmem:[%s374 + $0x74] sm:$0xf]
        %v434 = vld [vmem:[%s374 + $0x78] sm:$0xf]
        %v435 = vld [vmem:[%s374 + $0x7c] sm:$0xf]
        %v436 = vld [vmem:[%s4] sm:$0xf]
        %v437 = vld [vmem:[%s4 + $0x4] sm:$0xf]
        %v438 = vld [vmem:[%s4 + $0x8] sm:$0xf]
        %v439 = vld [vmem:[%s4 + $0xc] sm:$0xf]
        %v440 = vld [vmem:[%s5] sm:$0x1]
        %v442 = vperm.slane %v440, 0
        %v476 = vunpack.c.l.b16 %v404
        %v477 = vunpack.c.l.b16 %v405
        %v478 = vunpack.c.l.b16 %v406
        %v479 = vunpack.c.l.b16 %v407
        %v480 = vunpack.c.l.b16 %v408
        %v481 = vunpack.c.l.b16 %v409
        %v482 = vunpack.c.l.b16 %v410
        %v483 = vunpack.c.l.b16 %v411
        %v484 = vunpack.c.l.b16 %v412
        %v485 = vunpack.c.l.b16 %v413
        %v486 = vunpack.c.l.b16 %v414
        %v487 = vunpack.c.l.b16 %v415
        %v488 = vunpack.c.l.b16 %v416
        %v489 = vunpack.c.l.b16 %v417
        %v490 = vunpack.c.l.b16 %v418
        %v491 = vunpack.c.l.b16 %v419
        %v492 = vunpack.c.l.b16 %v420
        %v493 = vunpack.c.l.b16 %v421
        %v494 = vunpack.c.l.b16 %v422
        %v495 = vunpack.c.l.b16 %v423
        %v496 = vunpack.c.l.b16 %v424
        %v497 = vunpack.c.l.b16 %v425
        %v498 = vunpack.c.l.b16 %v426
        %v499 = vunpack.c.l.b16 %v427
        %v500 = vunpack.c.l.b16 %v428
        %v501 = vunpack.c.l.b16 %v429
        %v502 = vunpack.c.l.b16 %v430
        %v503 = vunpack.c.l.b16 %v431
        %v504 = vunpack.c.l.b16 %v432
        %v505 = vunpack.c.l.b16 %v433
        %v506 = vunpack.c.l.b16 %v434
        %v507 = vunpack.c.l.b16 %v435
        %v508 = vpack.c.b16 %v477, %v476
        %v509 = vpack.c.b16 %v479, %v478
        %v510 = vpack.c.b16 %v481, %v480
        %v511 = vpack.c.b16 %v483, %v482
        %v512 = vpack.c.b16 %v485, %v484
        %v513 = vpack.c.b16 %v487, %v486
        %v514 = vpack.c.b16 %v489, %v488
        %v515 = vpack.c.b16 %v491, %v490
        %v516 = vpack.c.b16 %v493, %v492
        %v517 = vpack.c.b16 %v495, %v494
        %v518 = vpack.c.b16 %v497, %v496
        %v519 = vpack.c.b16 %v499, %v498
        %v520 = vpack.c.b16 %v501, %v500
        %v521 = vpack.c.b16 %v503, %v502
        %v522 = vpack.c.b16 %v505, %v504
        %v523 = vpack.c.b16 %v507, %v506
        %v528 = vunpack.c.l.b16 %v436
        %v529 = vunpack.c.l.b16 %v437
        %v530 = vunpack.c.l.b16 %v438
        %v531 = vunpack.c.l.b16 %v439
        %v532 = vpack.c.b16 %v529, %v528
        %v533 = vpack.c.b16 %v531, %v530
        %vm536 = vcmask 261120
        %v538 = vsel %vm536, %v508, 0
        %v541 = vsel %vm536, %v509, 0
        %v544 = vsel %vm536, %v510, 0
        %v547 = vsel %vm536, %v511, 0
        %v550 = vsel %vm536, %v512, 0
        %v553 = vsel %vm536, %v513, 0
        %v556 = vsel %vm536, %v514, 0
        %v559 = vsel %vm536, %v515, 0
        %v562 = vsel %vm536, %v516, 0
        %v565 = vsel %vm536, %v517, 0
        %v568 = vsel %vm536, %v518, 0
        %v571 = vsel %vm536, %v519, 0
        %v574 = vsel %vm536, %v520, 0
        %v577 = vsel %vm536, %v521, 0
        %v580 = vsel %vm536, %v522, 0
        %v583 = vsel %vm536, %v523, 0
        %585 = vmatpush.bf16.msra.mxu0 0
        %586 = vmatpush.bf16.msra.mxu0 0
        %587 = vmatpush.bf16.msra.mxu0 0
        %588 = vmatpush.bf16.msra.mxu0 0
        %589 = vmatpush.bf16.msra.mxu0 0
        %590 = vmatpush.bf16.msra.mxu0 0
        %591 = vmatpush.bf16.msra.mxu0 %v533
        %592 = vmatpush.bf16.msra.mxu0 %v532
        %593 = vmatmul.bf16.gmra.mxu0 %v538
        %v594 = vpop.f32.mrf.mxu0
        %v595 = vadd.f32 %v442, %v594
        %v596 = vpop.f32.mrf.mxu0
        %v597 = vadd.f32 %v442, %v596
        %598 = vmatmul.bf16.gmra.mxu0 %v541
        %v599 = vpop.f32.mrf.mxu0
        %v600 = vadd.f32 %v442, %v599
        %v601 = vpop.f32.mrf.mxu0
        %v602 = vadd.f32 %v442, %v601
        %603 = vmatmul.bf16.gmra.mxu0 %v544
        %v604 = vpop.f32.mrf.mxu0
        %v605 = vadd.f32 %v442, %v604
        %v606 = vpop.f32.mrf.mxu0
        %v607 = vadd.f32 %v442, %v606
        %608 = vmatmul.bf16.gmra.mxu0 %v547
        %v609 = vpop.f32.mrf.mxu0
        %v610 = vadd.f32 %v442, %v609
        %v611 = vpop.f32.mrf.mxu0
        %v612 = vadd.f32 %v442, %v611
        %613 = vmatmul.bf16.gmra.mxu0 %v550
        %v614 = vpop.f32.mrf.mxu0
        %v615 = vadd.f32 %v442, %v614
        %v616 = vpop.f32.mrf.mxu0
        %v617 = vadd.f32 %v442, %v616
        %618 = vmatmul.bf16.gmra.mxu0 %v553
        %v619 = vpop.f32.mrf.mxu0
        %v620 = vadd.f32 %v442, %v619
        %v621 = vpop.f32.mrf.mxu0
        %v622 = vadd.f32 %v442, %v621
        %623 = vmatmul.bf16.gmra.mxu0 %v556
        %v624 = vpop.f32.mrf.mxu0
        %v625 = vadd.f32 %v442, %v624
        %v626 = vpop.f32.mrf.mxu0
        %v627 = vadd.f32 %v442, %v626
        %628 = vmatmul.bf16.gmra.mxu0 %v559
        %v629 = vpop.f32.mrf.mxu0
        %v630 = vadd.f32 %v442, %v629
        %v631 = vpop.f32.mrf.mxu0
        %v632 = vadd.f32 %v442, %v631
        %633 = vmatmul.bf16.gmra.mxu0 %v562
        %v634 = vpop.f32.mrf.mxu0
        %v635 = vadd.f32 %v442, %v634
        %v636 = vpop.f32.mrf.mxu0
        %v637 = vadd.f32 %v442, %v636
        %638 = vmatmul.bf16.gmra.mxu0 %v565
        %v639 = vpop.f32.mrf.mxu0
        %v640 = vadd.f32 %v442, %v639
        %v641 = vpop.f32.mrf.mxu0
        %v642 = vadd.f32 %v442, %v641
        %643 = vmatmul.bf16.gmra.mxu0 %v568
        %v644 = vpop.f32.mrf.mxu0
        %v645 = vadd.f32 %v442, %v644
        %v646 = vpop.f32.mrf.mxu0
        %v647 = vadd.f32 %v442, %v646
        %648 = vmatmul.bf16.gmra.mxu0 %v571
        %v649 = vpop.f32.mrf.mxu0
        %v650 = vadd.f32 %v442, %v649
        %v651 = vpop.f32.mrf.mxu0
        %v652 = vadd.f32 %v442, %v651
        %653 = vmatmul.bf16.gmra.mxu0 %v574
        %v654 = vpop.f32.mrf.mxu0
        %v655 = vadd.f32 %v442, %v654
        %v656 = vpop.f32.mrf.mxu0
        %v657 = vadd.f32 %v442, %v656
        %658 = vmatmul.bf16.gmra.mxu0 %v577
        %v659 = vpop.f32.mrf.mxu0
        %v660 = vadd.f32 %v442, %v659
        %v661 = vpop.f32.mrf.mxu0
        %v662 = vadd.f32 %v442, %v661
        %663 = vmatmul.bf16.gmra.mxu0 %v580
        %v664 = vpop.f32.mrf.mxu0
        %v665 = vadd.f32 %v442, %v664
        %v666 = vpop.f32.mrf.mxu0
        %v667 = vadd.f32 %v442, %v666
        %668 = vmatmul.bf16.gmra.mxu0 %v583
        %v669 = vpop.f32.mrf.mxu0
        %v670 = vadd.f32 %v442, %v669
        %v671 = vpop.f32.mrf.mxu0
        %v672 = vadd.f32 %v442, %v671
        %673 = vdwg.mxu0
        %vm674 = vcmp.gt.f32.partialorder %v595, 0.0
        %vm675 = vcmp.gt.f32.partialorder %v597, 0.0
        %vm676 = vcmp.gt.f32.partialorder %v600, 0.0
        %vm677 = vcmp.gt.f32.partialorder %v602, 0.0
        %vm678 = vcmp.gt.f32.partialorder %v605, 0.0
        %vm679 = vcmp.gt.f32.partialorder %v607, 0.0
        %vm680 = vcmp.gt.f32.partialorder %v610, 0.0
        %vm681 = vcmp.gt.f32.partialorder %v612, 0.0
        %vm682 = vcmp.gt.f32.partialorder %v615, 0.0
        %vm683 = vcmp.gt.f32.partialorder %v617, 0.0
        %vm684 = vcmp.gt.f32.partialorder %v620, 0.0
        %vm685 = vcmp.gt.f32.partialorder %v622, 0.0
        %vm686 = vcmp.gt.f32.partialorder %v625, 0.0
        %vm687 = vcmp.gt.f32.partialorder %v627, 0.0
        %vm688 = vcmp.gt.f32.partialorder %v630, 0.0
        %vm689 = vcmp.gt.f32.partialorder %v632, 0.0
        %vm690 = vcmp.gt.f32.partialorder %v635, 0.0
        %vm691 = vcmp.gt.f32.partialorder %v637, 0.0
        %vm692 = vcmp.gt.f32.partialorder %v640, 0.0
        %vm693 = vcmp.gt.f32.partialorder %v642, 0.0
        %vm694 = vcmp.gt.f32.partialorder %v645, 0.0
        %vm695 = vcmp.gt.f32.partialorder %v647, 0.0
        %vm696 = vcmp.gt.f32.partialorder %v650, 0.0
        %vm697 = vcmp.gt.f32.partialorder %v652, 0.0
        %vm698 = vcmp.gt.f32.partialorder %v655, 0.0
        %vm699 = vcmp.gt.f32.partialorder %v657, 0.0
        %vm700 = vcmp.gt.f32.partialorder %v660, 0.0
        %vm701 = vcmp.gt.f32.partialorder %v662, 0.0
        %vm702 = vcmp.gt.f32.partialorder %v665, 0.0
        %vm703 = vcmp.gt.f32.partialorder %v667, 0.0
        %vm704 = vcmp.gt.f32.partialorder %v670, 0.0
        %vm705 = vcmp.gt.f32.partialorder %v672, 0.0
        %v706 = vmul.f32 %v595, 0.01
        %v707 = vmul.f32 %v597, 0.01
        %v708 = vmul.f32 %v600, 0.01
        %v709 = vmul.f32 %v602, 0.01
        %v710 = vmul.f32 %v605, 0.01
        %v711 = vmul.f32 %v607, 0.01
        %v712 = vmul.f32 %v610, 0.01
        %v713 = vmul.f32 %v612, 0.01
        %v714 = vmul.f32 %v615, 0.01
        %v715 = vmul.f32 %v617, 0.01
        %v716 = vmul.f32 %v620, 0.01
        %v717 = vmul.f32 %v622, 0.01
        %v718 = vmul.f32 %v625, 0.01
        %v719 = vmul.f32 %v627, 0.01
        %v720 = vmul.f32 %v630, 0.01
        %v721 = vmul.f32 %v632, 0.01
        %v722 = vmul.f32 %v635, 0.01
        %v723 = vmul.f32 %v637, 0.01
        %v724 = vmul.f32 %v640, 0.01
        %v725 = vmul.f32 %v642, 0.01
        %v726 = vmul.f32 %v645, 0.01
        %v727 = vmul.f32 %v647, 0.01
        %v728 = vmul.f32 %v650, 0.01
        %v729 = vmul.f32 %v652, 0.01
        %v730 = vmul.f32 %v655, 0.01
        %v731 = vmul.f32 %v657, 0.01
        %v732 = vmul.f32 %v660, 0.01
        %v733 = vmul.f32 %v662, 0.01
        %v734 = vmul.f32 %v665, 0.01
        %v735 = vmul.f32 %v667, 0.01
        %v736 = vmul.f32 %v670, 0.01
        %v737 = vmul.f32 %v672, 0.01
        %v738 = vsel %vm674, %v595, %v706
        %v739 = vsel %vm675, %v597, %v707
        %v740 = vsel %vm676, %v600, %v708
        %v741 = vsel %vm677, %v602, %v709
        %v742 = vsel %vm678, %v605, %v710
        %v743 = vsel %vm679, %v607, %v711
        %v744 = vsel %vm680, %v610, %v712
        %v745 = vsel %vm681, %v612, %v713
        %v746 = vsel %vm682, %v615, %v714
        %v747 = vsel %vm683, %v617, %v715
        %v748 = vsel %vm684, %v620, %v716
        %v749 = vsel %vm685, %v622, %v717
        %v750 = vsel %vm686, %v625, %v718
        %v751 = vsel %vm687, %v627, %v719
        %v752 = vsel %vm688, %v630, %v720
        %v753 = vsel %vm689, %v632, %v721
        %v754 = vsel %vm690, %v635, %v722
        %v755 = vsel %vm691, %v637, %v723
        %v756 = vsel %vm692, %v640, %v724
        %v757 = vsel %vm693, %v642, %v725
        %v758 = vsel %vm694, %v645, %v726
        %v759 = vsel %vm695, %v647, %v727
        %v760 = vsel %vm696, %v650, %v728
        %v761 = vsel %vm697, %v652, %v729
        %v762 = vsel %vm698, %v655, %v730
        %v763 = vsel %vm699, %v657, %v731
        %v764 = vsel %vm700, %v660, %v732
        %v765 = vsel %vm701, %v662, %v733
        %v766 = vsel %vm702, %v665, %v734
        %v767 = vsel %vm703, %v667, %v735
        %v768 = vsel %vm704, %v670, %v736
        %v769 = vsel %vm705, %v672, %v737
        %v770 = vld [vmem:[%s357] sm:$0xff]
        %v771 = vld [vmem:[%s357 + $0x8] sm:$0xff]
        %v772 = vld [vmem:[%s357 + $0x10] sm:$0xff]
        %v773 = vld [vmem:[%s357 + $0x18] sm:$0xff]
        %v774 = vld [vmem:[%s357 + $0x20] sm:$0xff]
        %v775 = vld [vmem:[%s357 + $0x28] sm:$0xff]
        %v776 = vld [vmem:[%s357 + $0x30] sm:$0xff]
        %v777 = vld [vmem:[%s357 + $0x38] sm:$0xff]
        %v778 = vld [vmem:[%s357 + $0x40] sm:$0xff]
        %v779 = vld [vmem:[%s357 + $0x48] sm:$0xff]
        %v780 = vld [vmem:[%s357 + $0x50] sm:$0xff]
        %v781 = vld [vmem:[%s357 + $0x58] sm:$0xff]
        %v782 = vld [vmem:[%s357 + $0x60] sm:$0xff]
        %v783 = vld [vmem:[%s357 + $0x68] sm:$0xff]
        %v784 = vld [vmem:[%s357 + $0x70] sm:$0xff]
        %v785 = vld [vmem:[%s357 + $0x78] sm:$0xff]
        %v786 = vld [vmem:[%s367] sm:$0xff]
        %v787 = vld [vmem:[%s367 + $0x8] sm:$0xff]
        %v788 = vld [vmem:[%s367 + $0x10] sm:$0xff]
        %v789 = vld [vmem:[%s367 + $0x18] sm:$0xff]
        %v790 = vld [vmem:[%s367 + $0x20] sm:$0xff]
        %v791 = vld [vmem:[%s367 + $0x28] sm:$0xff]
        %v792 = vld [vmem:[%s367 + $0x30] sm:$0xff]
        %v793 = vld [vmem:[%s367 + $0x38] sm:$0xff]
        %v794 = vld [vmem:[%s367 + $0x40] sm:$0xff]
        %v795 = vld [vmem:[%s367 + $0x48] sm:$0xff]
        %v796 = vld [vmem:[%s367 + $0x50] sm:$0xff]
        %v797 = vld [vmem:[%s367 + $0x58] sm:$0xff]
        %v798 = vld [vmem:[%s367 + $0x60] sm:$0xff]
        %v799 = vld [vmem:[%s367 + $0x68] sm:$0xff]
        %v800 = vld [vmem:[%s367 + $0x70] sm:$0xff]
        %v801 = vld [vmem:[%s367 + $0x78] sm:$0xff]
        %v802 = vpack.c.bf16 %v739, %v738
        %v803 = vpack.c.bf16 %v741, %v740
        %v804 = vpack.c.bf16 %v743, %v742
        %v805 = vpack.c.bf16 %v745, %v744
        %v806 = vpack.c.bf16 %v747, %v746
        %v807 = vpack.c.bf16 %v749, %v748
        %v808 = vpack.c.bf16 %v751, %v750
        %v809 = vpack.c.bf16 %v753, %v752
        %v810 = vpack.c.bf16 %v755, %v754
        %v811 = vpack.c.bf16 %v757, %v756
        %v812 = vpack.c.bf16 %v759, %v758
        %v813 = vpack.c.bf16 %v761, %v760
        %v814 = vpack.c.bf16 %v763, %v762
        %v815 = vpack.c.bf16 %v765, %v764
        %v816 = vpack.c.bf16 %v767, %v766
        %v817 = vpack.c.bf16 %v769, %v768
        %v834 = vunpack.c.l.b16 %v786
        %v835 = vunpack.c.h.b16 %v786
        %v836 = vunpack.c.l.b16 %v787
        %v837 = vunpack.c.h.b16 %v787
        %v838 = vunpack.c.l.b16 %v788
        %v839 = vunpack.c.h.b16 %v788
        %v840 = vunpack.c.l.b16 %v789
        %v841 = vunpack.c.h.b16 %v789
        %v842 = vunpack.c.l.b16 %v790
        %v843 = vunpack.c.h.b16 %v790
        %v844 = vunpack.c.l.b16 %v791
        %v845 = vunpack.c.h.b16 %v791
        %v846 = vunpack.c.l.b16 %v792
        %v847 = vunpack.c.h.b16 %v792
        %v848 = vunpack.c.l.b16 %v793
        %v849 = vunpack.c.h.b16 %v793
        %v850 = vunpack.c.l.b16 %v794
        %v851 = vunpack.c.h.b16 %v794
        %v852 = vunpack.c.l.b16 %v795
        %v853 = vunpack.c.h.b16 %v795
        %v854 = vunpack.c.l.b16 %v796
        %v855 = vunpack.c.h.b16 %v796
        %v856 = vunpack.c.l.b16 %v797
        %v857 = vunpack.c.h.b16 %v797
        %v858 = vunpack.c.l.b16 %v798
        %v859 = vunpack.c.h.b16 %v798
        %v860 = vunpack.c.l.b16 %v799
        %v861 = vunpack.c.h.b16 %v799
        %v862 = vunpack.c.l.b16 %v800
        %v863 = vunpack.c.h.b16 %v800
        %v864 = vunpack.c.l.b16 %v801
        %v865 = vunpack.c.h.b16 %v801
        %v866 = vpack.c.b16 %v836, %v834
        %v867 = vpack.c.b16 %v837, %v835
        %v868 = vpack.c.b16 %v840, %v838
        %v869 = vpack.c.b16 %v841, %v839
        %v870 = vpack.c.b16 %v844, %v842
        %v871 = vpack.c.b16 %v845, %v843
        %v872 = vpack.c.b16 %v848, %v846
        %v873 = vpack.c.b16 %v849, %v847
        %v874 = vpack.c.b16 %v852, %v850
        %v875 = vpack.c.b16 %v853, %v851
        %v876 = vpack.c.b16 %v856, %v854
        %v877 = vpack.c.b16 %v857, %v855
        %v878 = vpack.c.b16 %v860, %v858
        %v879 = vpack.c.b16 %v861, %v859
        %v880 = vpack.c.b16 %v864, %v862
        %v881 = vpack.c.b16 %v865, %v863
        %898 = vmatpush.bf16.msra.mxu0 %v809
        %899 = vmatpush.bf16.msra.mxu0 %v808
        %900 = vmatpush.bf16.msra.mxu0 %v807
        %901 = vmatpush.bf16.msra.mxu0 %v806
        %902 = vmatpush.bf16.msra.mxu0 %v805
        %903 = vmatpush.bf16.msra.mxu0 %v804
        %904 = vmatpush.bf16.msra.mxu0 %v803
        %905 = vmatpush.bf16.msra.mxu0 %v802
        %906 = vmatmul.bf16.gmra.mxu0 %v866
        %v907 = vpop.f32.mrf.mxu0
        %v908 = vadd.f32 0.0, %v907
        %v909 = vpop.f32.mrf.mxu0
        %v910 = vadd.f32 0.0, %v909
        %911 = vmatmul.bf16.gmra.mxu0 %v868
        %v912 = vpop.f32.mrf.mxu0
        %v913 = vadd.f32 0.0, %v912
        %v914 = vpop.f32.mrf.mxu0
        %v915 = vadd.f32 0.0, %v914
        %916 = vmatmul.bf16.gmra.mxu0 %v870
        %v917 = vpop.f32.mrf.mxu0
        %v918 = vadd.f32 0.0, %v917
        %v919 = vpop.f32.mrf.mxu0
        %v920 = vadd.f32 0.0, %v919
        %921 = vmatmul.bf16.gmra.mxu0 %v872
        %v922 = vpop.f32.mrf.mxu0
        %v923 = vadd.f32 0.0, %v922
        %v924 = vpop.f32.mrf.mxu0
        %v925 = vadd.f32 0.0, %v924
        %926 = vmatmul.bf16.gmra.mxu0 %v874
        %v927 = vpop.f32.mrf.mxu0
        %v928 = vadd.f32 0.0, %v927
        %v929 = vpop.f32.mrf.mxu0
        %v930 = vadd.f32 0.0, %v929
        %931 = vmatmul.bf16.gmra.mxu0 %v876
        %v932 = vpop.f32.mrf.mxu0
        %v933 = vadd.f32 0.0, %v932
        %v934 = vpop.f32.mrf.mxu0
        %v935 = vadd.f32 0.0, %v934
        %936 = vmatmul.bf16.gmra.mxu0 %v878
        %v937 = vpop.f32.mrf.mxu0
        %v938 = vadd.f32 0.0, %v937
        %v939 = vpop.f32.mrf.mxu0
        %v940 = vadd.f32 0.0, %v939
        %941 = vmatmul.bf16.gmra.mxu0 %v880
        %v942 = vpop.f32.mrf.mxu0
        %v943 = vadd.f32 0.0, %v942
        %v944 = vpop.f32.mrf.mxu0
        %v945 = vadd.f32 0.0, %v944
        %946 = vdwg.mxu0
        %947 = vmatpush.bf16.msra.mxu0 %v817
        %948 = vmatpush.bf16.msra.mxu0 %v816
        %949 = vmatpush.bf16.msra.mxu0 %v815
        %950 = vmatpush.bf16.msra.mxu0 %v814
        %951 = vmatpush.bf16.msra.mxu0 %v813
        %952 = vmatpush.bf16.msra.mxu0 %v812
        %953 = vmatpush.bf16.msra.mxu0 %v811
        %954 = vmatpush.bf16.msra.mxu0 %v810
        %955 = vmatmul.bf16.gmra.mxu0 %v867
        %v956 = vpop.f32.mrf.mxu0
        %v957 = vadd.f32 %v908, %v956
        %v958 = vpop.f32.mrf.mxu0
        %v959 = vadd.f32 %v910, %v958
        %960 = vmatmul.bf16.gmra.mxu0 %v869
        %v961 = vpop.f32.mrf.mxu0
        %v962 = vadd.f32 %v913, %v961
        %v963 = vpop.f32.mrf.mxu0
        %v964 = vadd.f32 %v915, %v963
        %965 = vmatmul.bf16.gmra.mxu0 %v871
        %v966 = vpop.f32.mrf.mxu0
        %v967 = vadd.f32 %v918, %v966
        %v968 = vpop.f32.mrf.mxu0
        %v969 = vadd.f32 %v920, %v968
        %970 = vmatmul.bf16.gmra.mxu0 %v873
        %v971 = vpop.f32.mrf.mxu0
        %v972 = vadd.f32 %v923, %v971
        %v973 = vpop.f32.mrf.mxu0
        %v974 = vadd.f32 %v925, %v973
        %975 = vmatmul.bf16.gmra.mxu0 %v875
        %v976 = vpop.f32.mrf.mxu0
        %v977 = vadd.f32 %v928, %v976
        %v978 = vpop.f32.mrf.mxu0
        %v979 = vadd.f32 %v930, %v978
        %980 = vmatmul.bf16.gmra.mxu0 %v877
        %v981 = vpop.f32.mrf.mxu0
        %v982 = vadd.f32 %v933, %v981
        %v983 = vpop.f32.mrf.mxu0
        %v984 = vadd.f32 %v935, %v983
        %985 = vmatmul.bf16.gmra.mxu0 %v879
        %v986 = vpop.f32.mrf.mxu0
        %v987 = vadd.f32 %v938, %v986
        %v988 = vpop.f32.mrf.mxu0
        %v989 = vadd.f32 %v940, %v988
        %990 = vmatmul.bf16.gmra.mxu0 %v881
        %v991 = vpop.f32.mrf.mxu0
        %v992 = vadd.f32 %v943, %v991
        %v993 = vpop.f32.mrf.mxu0
        %v994 = vadd.f32 %v945, %v993
        %995 = vdwg.mxu0
        %v996 = vadd.f32 %v770, %v957
        %v997 = vadd.f32 %v771, %v959
        %v998 = vadd.f32 %v772, %v962
        %v999 = vadd.f32 %v773, %v964
        %v1000 = vadd.f32 %v774, %v967
        %v1001 = vadd.f32 %v775, %v969
        %v1002 = vadd.f32 %v776, %v972
        %v1003 = vadd.f32 %v777, %v974
        %v1004 = vadd.f32 %v778, %v977
        %v1005 = vadd.f32 %v779, %v979
        %v1006 = vadd.f32 %v780, %v982
        %v1007 = vadd.f32 %v781, %v984
        %v1008 = vadd.f32 %v782, %v987
        %v1009 = vadd.f32 %v783, %v989
        %v1010 = vadd.f32 %v784, %v992
        %v1011 = vadd.f32 %v785, %v994
        %1012 = vst [vmem:[%s357] sm:$0xff] %v996
        %1013 = vst [vmem:[%s357 + $0x8] sm:$0xff] %v997
        %1014 = vst [vmem:[%s357 + $0x10] sm:$0xff] %v998
        %1015 = vst [vmem:[%s357 + $0x18] sm:$0xff] %v999
        %1016 = vst [vmem:[%s357 + $0x20] sm:$0xff] %v1000
        %1017 = vst [vmem:[%s357 + $0x28] sm:$0xff] %v1001
        %1018 = vst [vmem:[%s357 + $0x30] sm:$0xff] %v1002
        %1019 = vst [vmem:[%s357 + $0x38] sm:$0xff] %v1003
        %1020 = vst [vmem:[%s357 + $0x40] sm:$0xff] %v1004
        %1021 = vst [vmem:[%s357 + $0x48] sm:$0xff] %v1005
        %1022 = vst [vmem:[%s357 + $0x50] sm:$0xff] %v1006
        %1023 = vst [vmem:[%s357 + $0x58] sm:$0xff] %v1007
        %1024 = vst [vmem:[%s357 + $0x60] sm:$0xff] %v1008
        %1025 = vst [vmem:[%s357 + $0x68] sm:$0xff] %v1009
        %1026 = vst [vmem:[%s357 + $0x70] sm:$0xff] %v1010
        %1027 = vst [vmem:[%s357 + $0x78] sm:$0xff] %v1011
        // Predicated region
        $region57: #{tpu_custom_call.1} parent=51 // pred_check
          %p1028 = pneg %p384
        $region58: #{tpu_custom_call.1} parent=51 // pred_check_branch
          %1030 = sbr.rel (%p1028) target = $region60
        $region59: #{tpu_custom_call.1} parent=51 // pred_region
          %v1031 = vld [vmem:[%s380] sm:$0xf]
          %v1032 = vld [vmem:[%s380 + $0x4] sm:$0xf]
          %v1033 = vld [vmem:[%s380 + $0x8] sm:$0xf]
          %v1034 = vld [vmem:[%s380 + $0xc] sm:$0xf]
          %v1035 = vld [vmem:[%s380 + $0x10] sm:$0xf]
          %v1036 = vld [vmem:[%s380 + $0x14] sm:$0xf]
          %v1037 = vld [vmem:[%s380 + $0x18] sm:$0xf]
          %v1038 = vld [vmem:[%s380 + $0x1c] sm:$0xf]
          %v1039 = vld [vmem:[%s380 + $0x20] sm:$0xf]
          %v1040 = vld [vmem:[%s380 + $0x24] sm:$0xf]
          %v1041 = vld [vmem:[%s380 + $0x28] sm:$0xf]
          %v1042 = vld [vmem:[%s380 + $0x2c] sm:$0xf]
          %v1043 = vld [vmem:[%s380 + $0x30] sm:$0xf]
          %v1044 = vld [vmem:[%s380 + $0x34] sm:$0xf]
          %v1045 = vld [vmem:[%s380 + $0x38] sm:$0xf]
          %v1046 = vld [vmem:[%s380 + $0x3c] sm:$0xf]
          %v1047 = vld [vmem:[%s6] sm:$0xf]
          %v1048 = vld [vmem:[%s6 + $0x4] sm:$0xf]
          %v1049 = vld [vmem:[%s6 + $0x8] sm:$0xf]
          %v1050 = vld [vmem:[%s6 + $0xc] sm:$0xf]
          %v1051 = vld [vmem:[%s7] sm:$0x1]
          %v1053 = vperm.slane %v1051, 0
          %v1071 = vunpack.c.l.b16 %v1031
          %v1072 = vunpack.c.l.b16 %v1032
          %v1073 = vunpack.c.l.b16 %v1033
          %v1074 = vunpack.c.l.b16 %v1034
          %v1075 = vunpack.c.l.b16 %v1035
          %v1076 = vunpack.c.l.b16 %v1036
          %v1077 = vunpack.c.l.b16 %v1037
          %v1078 = vunpack.c.l.b16 %v1038
          %v1079 = vunpack.c.l.b16 %v1039
          %v1080 = vunpack.c.l.b16 %v1040
          %v1081 = vunpack.c.l.b16 %v1041
          %v1082 = vunpack.c.l.b16 %v1042
          %v1083 = vunpack.c.l.b16 %v1043
          %v1084 = vunpack.c.l.b16 %v1044
          %v1085 = vunpack.c.l.b16 %v1045
          %v1086 = vunpack.c.l.b16 %v1046
          %v1087 = vpack.c.b16 %v1072, %v1071
          %v1088 = vpack.c.b16 %v1074, %v1073
          %v1089 = vpack.c.b16 %v1076, %v1075
          %v1090 = vpack.c.b16 %v1078, %v1077
          %v1091 = vpack.c.b16 %v1080, %v1079
          %v1092 = vpack.c.b16 %v1082, %v1081
          %v1093 = vpack.c.b16 %v1084, %v1083
          %v1094 = vpack.c.b16 %v1086, %v1085
          %v1099 = vunpack.c.l.b16 %v1047
          %v1100 = vunpack.c.l.b16 %v1048
          %v1101 = vunpack.c.l.b16 %v1049
          %v1102 = vunpack.c.l.b16 %v1050
          %v1103 = vpack.c.b16 %v1100, %v1099
          %v1104 = vpack.c.b16 %v1102, %v1101
          %v1108 = vsel %vm536, %v1087, 0
          %v1111 = vsel %vm536, %v1088, 0
          %v1114 = vsel %vm536, %v1089, 0
          %v1117 = vsel %vm536, %v1090, 0
          %v1120 = vsel %vm536, %v1091, 0
          %v1123 = vsel %vm536, %v1092, 0
          %v1126 = vsel %vm536, %v1093, 0
          %v1129 = vsel %vm536, %v1094, 0
          %1131 = vmatpush.bf16.msra.mxu0 0
          %1132 = vmatpush.bf16.msra.mxu0 0
          %1133 = vmatpush.bf16.msra.mxu0 0
          %1134 = vmatpush.bf16.msra.mxu0 0
          %1135 = vmatpush.bf16.msra.mxu0 0
          %1136 = vmatpush.bf16.msra.mxu0 0
          %1137 = vmatpush.bf16.msra.mxu0 %v1104
          %1138 = vmatpush.bf16.msra.mxu0 %v1103
          %1139 = vmatmul.bf16.gmra.mxu0 %v1108
          %v1140 = vpop.f32.mrf.mxu0
          %v1141 = vadd.f32 %v1053, %v1140
          %v1142 = vpop.f32.mrf.mxu0
          %v1143 = vadd.f32 %v1053, %v1142
          %1144 = vmatmul.bf16.gmra.mxu0 %v1111
          %v1145 = vpop.f32.mrf.mxu0
          %v1146 = vadd.f32 %v1053, %v1145
          %v1147 = vpop.f32.mrf.mxu0
          %v1148 = vadd.f32 %v1053, %v1147
          %1149 = vmatmul.bf16.gmra.mxu0 %v1114
          %v1150 = vpop.f32.mrf.mxu0
          %v1151 = vadd.f32 %v1053, %v1150
          %v1152 = vpop.f32.mrf.mxu0
          %v1153 = vadd.f32 %v1053, %v1152
          %1154 = vmatmul.bf16.gmra.mxu0 %v1117
          %v1155 = vpop.f32.mrf.mxu0
          %v1156 = vadd.f32 %v1053, %v1155
          %v1157 = vpop.f32.mrf.mxu0
          %v1158 = vadd.f32 %v1053, %v1157
          %1159 = vmatmul.bf16.gmra.mxu0 %v1120
          %v1160 = vpop.f32.mrf.mxu0
          %v1161 = vadd.f32 %v1053, %v1160
          %v1162 = vpop.f32.mrf.mxu0
          %v1163 = vadd.f32 %v1053, %v1162
          %1164 = vmatmul.bf16.gmra.mxu0 %v1123
          %v1165 = vpop.f32.mrf.mxu0
          %v1166 = vadd.f32 %v1053, %v1165
          %v1167 = vpop.f32.mrf.mxu0
          %v1168 = vadd.f32 %v1053, %v1167
          %1169 = vmatmul.bf16.gmra.mxu0 %v1126
          %v1170 = vpop.f32.mrf.mxu0
          %v1171 = vadd.f32 %v1053, %v1170
          %v1172 = vpop.f32.mrf.mxu0
          %v1173 = vadd.f32 %v1053, %v1172
          %1174 = vmatmul.bf16.gmra.mxu0 %v1129
          %v1175 = vpop.f32.mrf.mxu0
          %v1176 = vadd.f32 %v1053, %v1175
          %v1177 = vpop.f32.mrf.mxu0
          %v1178 = vadd.f32 %v1053, %v1177
          %1179 = vdwg.mxu0
          %vm1180 = vcmp.gt.f32.partialorder %v1141, 0.0
          %vm1181 = vcmp.gt.f32.partialorder %v1143, 0.0
          %vm1182 = vcmp.gt.f32.partialorder %v1146, 0.0
          %vm1183 = vcmp.gt.f32.partialorder %v1148, 0.0
          %vm1184 = vcmp.gt.f32.partialorder %v1151, 0.0
          %vm1185 = vcmp.gt.f32.partialorder %v1153, 0.0
          %vm1186 = vcmp.gt.f32.partialorder %v1156, 0.0
          %vm1187 = vcmp.gt.f32.partialorder %v1158, 0.0
          %vm1188 = vcmp.gt.f32.partialorder %v1161, 0.0
          %vm1189 = vcmp.gt.f32.partialorder %v1163, 0.0
          %vm1190 = vcmp.gt.f32.partialorder %v1166, 0.0
          %vm1191 = vcmp.gt.f32.partialorder %v1168, 0.0
          %vm1192 = vcmp.gt.f32.partialorder %v1171, 0.0
          %vm1193 = vcmp.gt.f32.partialorder %v1173, 0.0
          %vm1194 = vcmp.gt.f32.partialorder %v1176, 0.0
          %vm1195 = vcmp.gt.f32.partialorder %v1178, 0.0
          %v1196 = vmul.f32 %v1141, 0.01
          %v1197 = vmul.f32 %v1143, 0.01
          %v1198 = vmul.f32 %v1146, 0.01
          %v1199 = vmul.f32 %v1148, 0.01
          %v1200 = vmul.f32 %v1151, 0.01
          %v1201 = vmul.f32 %v1153, 0.01
          %v1202 = vmul.f32 %v1156, 0.01
          %v1203 = vmul.f32 %v1158, 0.01
          %v1204 = vmul.f32 %v1161, 0.01
          %v1205 = vmul.f32 %v1163, 0.01
          %v1206 = vmul.f32 %v1166, 0.01
          %v1207 = vmul.f32 %v1168, 0.01
          %v1208 = vmul.f32 %v1171, 0.01
          %v1209 = vmul.f32 %v1173, 0.01
          %v1210 = vmul.f32 %v1176, 0.01
          %v1211 = vmul.f32 %v1178, 0.01
          %v1212 = vsel %vm1180, %v1141, %v1196
          %v1213 = vsel %vm1181, %v1143, %v1197
          %v1214 = vsel %vm1182, %v1146, %v1198
          %v1215 = vsel %vm1183, %v1148, %v1199
          %v1216 = vsel %vm1184, %v1151, %v1200
          %v1217 = vsel %vm1185, %v1153, %v1201
          %v1218 = vsel %vm1186, %v1156, %v1202
          %v1219 = vsel %vm1187, %v1158, %v1203
          %v1220 = vsel %vm1188, %v1161, %v1204
          %v1221 = vsel %vm1189, %v1163, %v1205
          %v1222 = vsel %vm1190, %v1166, %v1206
          %v1223 = vsel %vm1191, %v1168, %v1207
          %v1224 = vsel %vm1192, %v1171, %v1208
          %v1225 = vsel %vm1193, %v1173, %v1209
          %v1226 = vsel %vm1194, %v1176, %v1210
          %v1227 = vsel %vm1195, %v1178, %v1211
          %s1228 = sld [smem:[#allocation2]]
          %v1229 = vstv %s1228
          %v1230 = vmul.f32 %v1229, %v1212
          %v1231 = vmul.f32 %v1229, %v1213
          %v1232 = vmul.f32 %v1229, %v1214
          %v1233 = vmul.f32 %v1229, %v1215
          %v1234 = vmul.f32 %v1229, %v1216
          %v1235 = vmul.f32 %v1229, %v1217
          %v1236 = vmul.f32 %v1229, %v1218
          %v1237 = vmul.f32 %v1229, %v1219
          %v1238 = vmul.f32 %v1229, %v1220
          %v1239 = vmul.f32 %v1229, %v1221
          %v1240 = vmul.f32 %v1229, %v1222
          %v1241 = vmul.f32 %v1229, %v1223
          %v1242 = vmul.f32 %v1229, %v1224
          %v1243 = vmul.f32 %v1229, %v1225
          %v1244 = vmul.f32 %v1229, %v1226
          %v1245 = vmul.f32 %v1229, %v1227
          %s1246 = ssub.f32 1.0, %s1228
          %v1247 = vld [vmem:[%s357] sm:$0xff]
          %v1248 = vld [vmem:[%s357 + $0x8] sm:$0xff]
          %v1249 = vld [vmem:[%s357 + $0x10] sm:$0xff]
          %v1250 = vld [vmem:[%s357 + $0x18] sm:$0xff]
          %v1251 = vld [vmem:[%s357 + $0x20] sm:$0xff]
          %v1252 = vld [vmem:[%s357 + $0x28] sm:$0xff]
          %v1253 = vld [vmem:[%s357 + $0x30] sm:$0xff]
          %v1254 = vld [vmem:[%s357 + $0x38] sm:$0xff]
          %v1255 = vld [vmem:[%s357 + $0x40] sm:$0xff]
          %v1256 = vld [vmem:[%s357 + $0x48] sm:$0xff]
          %v1257 = vld [vmem:[%s357 + $0x50] sm:$0xff]
          %v1258 = vld [vmem:[%s357 + $0x58] sm:$0xff]
          %v1259 = vld [vmem:[%s357 + $0x60] sm:$0xff]
          %v1260 = vld [vmem:[%s357 + $0x68] sm:$0xff]
          %v1261 = vld [vmem:[%s357 + $0x70] sm:$0xff]
          %v1262 = vld [vmem:[%s357 + $0x78] sm:$0xff]
          %v1263 = vstv %s1246
          %v1264 = vmul.f32 %v1263, %v1247
          %v1265 = vmul.f32 %v1263, %v1248
          %v1266 = vmul.f32 %v1263, %v1249
          %v1267 = vmul.f32 %v1263, %v1250
          %v1268 = vmul.f32 %v1263, %v1251
          %v1269 = vmul.f32 %v1263, %v1252
          %v1270 = vmul.f32 %v1263, %v1253
          %v1271 = vmul.f32 %v1263, %v1254
          %v1272 = vmul.f32 %v1263, %v1255
          %v1273 = vmul.f32 %v1263, %v1256
          %v1274 = vmul.f32 %v1263, %v1257
          %v1275 = vmul.f32 %v1263, %v1258
          %v1276 = vmul.f32 %v1263, %v1259
          %v1277 = vmul.f32 %v1263, %v1260
          %v1278 = vmul.f32 %v1263, %v1261
          %v1279 = vmul.f32 %v1263, %v1262
          %v1280 = vadd.f32 %v1230, %v1264
          %v1281 = vadd.f32 %v1231, %v1265
          %v1282 = vadd.f32 %v1232, %v1266
          %v1283 = vadd.f32 %v1233, %v1267
          %v1284 = vadd.f32 %v1234, %v1268
          %v1285 = vadd.f32 %v1235, %v1269
          %v1286 = vadd.f32 %v1236, %v1270
          %v1287 = vadd.f32 %v1237, %v1271
          %v1288 = vadd.f32 %v1238, %v1272
          %v1289 = vadd.f32 %v1239, %v1273
          %v1290 = vadd.f32 %v1240, %v1274
          %v1291 = vadd.f32 %v1241, %v1275
          %v1292 = vadd.f32 %v1242, %v1276
          %v1293 = vadd.f32 %v1243, %v1277
          %v1294 = vadd.f32 %v1244, %v1278
          %v1295 = vadd.f32 %v1245, %v1279
          %1296 = vst [vmem:[%s357] sm:$0xff] %v1280
          %1297 = vst [vmem:[%s357 + $0x8] sm:$0xff] %v1281
          %1298 = vst [vmem:[%s357 + $0x10] sm:$0xff] %v1282
          %1299 = vst [vmem:[%s357 + $0x18] sm:$0xff] %v1283
          %1300 = vst [vmem:[%s357 + $0x20] sm:$0xff] %v1284
          %1301 = vst [vmem:[%s357 + $0x28] sm:$0xff] %v1285
          %1302 = vst [vmem:[%s357 + $0x30] sm:$0xff] %v1286
          %1303 = vst [vmem:[%s357 + $0x38] sm:$0xff] %v1287
          %1304 = vst [vmem:[%s357 + $0x40] sm:$0xff] %v1288
          %1305 = vst [vmem:[%s357 + $0x48] sm:$0xff] %v1289
          %1306 = vst [vmem:[%s357 + $0x50] sm:$0xff] %v1290
          %1307 = vst [vmem:[%s357 + $0x58] sm:$0xff] %v1291
          %1308 = vst [vmem:[%s357 + $0x60] sm:$0xff] %v1292
          %1309 = vst [vmem:[%s357 + $0x68] sm:$0xff] %v1293
          %1310 = vst [vmem:[%s357 + $0x70] sm:$0xff] %v1294
          %1311 = vst [vmem:[%s357 + $0x78] sm:$0xff] %v1295
        $region60: #{tpu_custom_call.1} parent=51 // pred_fallthru
          _
        %s1312 = sand.u32 %s228, 1
        %s1313 = scalar_lea.sflag [#allocation4], %s1312
        %s1314 = sand.u32 %s228, 1
        %s1315 = smul.addr %s1314, 128
        %s1316 = scalar_lea.vmem [#allocation3], %s1315
        // Predicated region
        $region61: #{tpu_custom_call.1} parent=51 // pred_check
          %p1317 = pneg %p238
        $region62: #{tpu_custom_call.1} parent=51 // pred_check_branch
          %1319 = sbr.rel (%p1317) target = $region64
        $region63: #{tpu_custom_call.1} parent=51 // pred_region
          %s1320 = smul.u32 16, %s27
          %1322 = vsyncadd %s1313, 0
          %s1323 = smul.addr %s1320, 8
          %s1324 = scalar_lea.hbm %s8, %s1323
          %s1325 = sshll.u32 %s1316, 4
          %s1326 = int_to_ptr.vmem [resolvable:$true] %s1325
          %s1327 = sshll.u32 %s1324, 4
          %s1328 = int_to_ptr.hbm [resolvable:$true] %s1327
          %1333 = dma.vmem_to_hbm [thread:$0]  %s1326, 2048, %s1328, %s1313, 128, 128, 8
        $region64: #{tpu_custom_call.1} parent=51 // pred_fallthru
          _
      $region52: #{tpu_custom_call.1} parent=5 // pred_fallthru
        _
      %p1334 = scmp.le.s32.totalorder 2, %s18
      // Predicated region
      $region65: #{tpu_custom_call.1} parent=5 // pred_check
        %p1335 = pneg %p1334
      $region66: #{tpu_custom_call.1} parent=5 // pred_check_branch
        %1337 = sbr.rel (%p1335) target = $region68
      $region67: #{tpu_custom_call.1} parent=5 // pred_region
        %s1338 = ssub.s32 %s18, 2
        // Predicated region
        $region69: #{tpu_custom_call.1} parent=67 // pred_check
          %p1339 = pneg %p244
        $region70: #{tpu_custom_call.1} parent=67 // pred_check_branch
          %1341 = sbr.rel (%p1339) target = $region72
        $region71: #{tpu_custom_call.1} parent=67 // pred_region
          %s1342 = sand.u32 %s229, 1
          %s1343 = scalar_lea.sflag [#allocation4], %s1342
          %s1344 = sand.u32 %s229, 1
          %s1345 = smul.addr %s1344, 128
          %s1346 = scalar_lea.vmem [#allocation3], %s1345
          %1348 = dma.done %s1343, 2048
        $region72: #{tpu_custom_call.1} parent=67 // pred_fallthru
          _
      $region68: #{tpu_custom_call.1} parent=5 // pred_fallthru
        _
    $region6: #{tpu_custom_call.1} parent=1 // loop_footer
      %s22 = sadd.s32 1, %s18
    $region7: #{tpu_custom_call.1} parent=1 // loop_footer_branch
      %17 = sbr.rel target = $region3
    $region8: #{tpu_custom_call.1} parent=1 // loop_exit
      _
    %1349 = vsyncpa [#allocation4], 1
    %s1350 = scalar_lea.sflag [#allocation4], 1
    %1351 = vsyncpa %s1350, 1

</llo_original>
